<compile_context>
chip_gen: v6e
topology: v6e:2x2x1
jax: 0.10.0
libtpu: 0.0.40
codegen_flags: <defaults>
</compile_context>

<pallas_src>
import jax
import jax.numpy as jnp
from jax import lax
from jax.experimental import pallas as pl
from jax.experimental.pallas import tpu as pltpu

EPS = 1e-5  # nn.InstanceNorm2d default (affine=False, biased variance)


# ----------------------------- Pallas kernel ------------------------------- #

def _make_resblock_kernel(C, H, W, N, P):
    """Fused kernel for P packed samples in padded-flat layout (P*C, N)."""
    Hp, Wp = H + 2, W + 2
    PC = P * C
    inv_hw = 1.0 / float(H * W)
    f32 = jnp.float32

    def kernel(x_ref, w1_ref, w2_ref, m_ref, o_ref):
        x = x_ref[...].astype(f32)          # (PC, N) packed padded-flat slab

        # Precomputed per-lane masks (constant across grid steps; built in the
        # wrapper -- no per-step float divide / floor).
        masks_f = m_ref[...]                # (8, N) float32
        m_int_f = masks_f[0:1, :]           # interior lanes (IN statistics)
        m_r0 = masks_f[1:2, :] > 0.5        # padded row 0
        m_rL = masks_f[2:3, :] > 0.5        # padded row Hp-1
        m_c0 = masks_f[3:4, :] > 0.5        # padded col 0
        m_cL = masks_f[4:5, :] > 0.5        # padded col Wp-1

        def shift(v, d):
            # shifted[:, q] = v[:, q + d]; wrap-around only lands on lanes that
            # are masked / discarded, never on interior results.
            if d == 0:
                return v
            return pltpu.roll(v, (-d) % N, 1)

        def conv3x3(v, w_ref):
            # ONE MXU matmul per conv: stack the 9 lane-rolled slabs along the
            # sublane axis -> (9*PC, N) and hit them with the block-diagonal
            # tap weight (PC, 9*PC) built in the wrapper.
            taps = [shift(v, (kh - 1) * Wp + (kw - 1))
                    for kh in range(3) for kw in range(3)]
            stacked = jnp.concatenate(taps, axis=0)           # (9*PC, N)
            return jnp.dot(w_ref[...].astype(f32), stacked,
                           preferred_element_type=f32)        # (PC, N)

        def inst_norm(v):
            # Mean-shifted two-pass stats over interior lanes only.  Each
            # sublane row is one (sample, channel) pair, so InstanceNorm
            # semantics are preserved under sample packing.
            vm = v * m_int_f
            mean = jnp.sum(vm, axis=1, keepdims=True) * inv_hw
            cen = (v - mean) * m_int_f
            var = jnp.sum(cen * cen, axis=1, keepdims=True) * inv_hw
            return (v - mean) * lax.rsqrt(var + EPS)

        # ---- stage 1: conv1 -> InstanceNorm -> ReLU (stays in VMEM) --------
        y = jnp.maximum(inst_norm(conv3x3(x, w1_ref)), 0.0)

        # ---- in-kernel ReflectionPad2d(1) of the intermediate --------------
        # pad row 0 := row 2, pad row Hp-1 := row Hp-3; then the same for the
        # columns (the column pass also fixes the corners).
        y = jnp.where(m_r0, shift(y, 2 * Wp), y)
        y = jnp.where(m_rL, shift(y, -2 * Wp), y)
        y = jnp.where(m_c0, shift(y, 2), y)
        y = jnp.where(m_cL, shift(y, -2), y)

        # ---- stage 2: conv2 -> InstanceNorm -> residual add ----------------
        z = inst_norm(conv3x3(y, w2_ref))
        o_ref[...] = (x + z).astype(o_ref.dtype)

    return kernel


# --------------------------- wrapper-side helpers --------------------------- #

def _packed_tap_weight(w, P):
    """(C,C,3,3) conv weight -> block-diagonal (P*C, 9*P*C) tap matrix.

    Wbig[p*C+co, t*P*C + p*C + ci] = w[co, ci, kh, kw],  t = kh*3 + kw.
    """
    C = w.shape[0]
    w9 = jnp.transpose(w, (2, 3, 0, 1)).reshape(9, C, C)     # [tap, co, ci]
    eye = jnp.eye(P, dtype=w.dtype)
    wbig = jnp.einsum('pq,tok->potqk', eye, w9)              # (P, C, 9, P, C)
    return wbig.reshape(P * C, 9 * P * C)


def _lane_masks(H, W, N):
    """(8, N) f32 mask slab: rows = [interior, row0, rowHp-1, col0, colWp-1, 0,0,0].

    Integer arithmetic on static shapes -> constant-folded by XLA.
    """
    Hp, Wp = H + 2, W + 2
    p = jnp.arange(N, dtype=jnp.int32)
    row = p // Wp
    col = p - row * Wp
    valid = p < Hp * Wp                      # excludes lane padding
    m_int = (row >= 1) & (row <= H) & (col >= 1) & (col <= W)
    m_r0 = row == 0
    m_rL = (row == Hp - 1) & valid
    m_c0 = (col == 0) & valid
    m_cL = (col == Wp - 1) & valid
    z = jnp.zeros((N,), jnp.bool_)
    return jnp.stack([m_int, m_r0, m_rL, m_c0, m_cL, z, z, z]).astype(jnp.float32)


# ------------------------------ JAX wrapper -------------------------------- #

@jax.jit
def res_block(x, w1, b1, w2, b2):
    """x: (B, C, H, W); w*: (C, C, 3, 3); b*: (C,).

    NOTE: the conv biases are accepted but unused -- they are algebraically
    cancelled by the affine=False InstanceNorm that immediately follows each
    conv (valid only for this exact module structure).
    """
    del b1, b2
    B, C, H, W = x.shape
    assert H >= 2 and W >= 2, "ReflectionPad2d(1) requires H, W >= 2"
    Hp, Wp = H + 2, W + 2
    hw_pad = Hp * Wp
    N = ((hw_pad + 127) // 128) * 128        # lane-dense slab width (x128)
    # Roll-based conv invariant: interior taps read lanes in [0, hw_pad).
    assert hw_pad <= N

    # Pack 2 samples per grid step along sublanes: with C=4 a single sample
    # only fills 4/8 sublanes of each vreg; packing doubles VPU/XLU efficiency
    # and halves the per-step fixed overhead.
    P = 2 if (B % 2 == 0) else 1
    G = B // P
    PC = P * C

    # XLA glue (layout plumbing only; pads/reshapes of a tiny activation).
    # TODO(synk): at production HxW move the input reflect-pad and the output
    # slice in-kernel to avoid the extra HBM passes (irrelevant at this size).
    xp = jnp.pad(x, ((0, 0), (0, 0), (1, 1), (1, 1)), mode="reflect")
    xpf = jnp.pad(xp.reshape(B, C, hw_pad), ((0, 0), (0, 0), (0, N - hw_pad)))
    xpk = xpf.reshape(G, PC, N)

    w1m = _packed_tap_weight(w1, P)          # (PC, 9*PC) block-diag tap matrix
    w2m = _packed_tap_weight(w2, P)
    masks = _lane_masks(H, W, N)             # (8, N) f32, constant-folded

    kernel = _make_resblock_kernel(C, H, W, N, P)
    flops = int(G * (4 * PC * 9 * PC * N + 40 * PC * N))
    bytes_accessed = int(4 * (2 * G * PC * N + 2 * PC * 9 * PC + 8 * N))

    # v7x: split the batch axis across both TensorCores when there is more
    # than one grid step (no-op on single-TC v5e/v6e).  With B=2 packed into a
    # single step there is nothing to shard, so keep the plain path.
    sem = (pltpu.CORE_PARALLEL,) if G > 1 else ("arbitrary",)

    out_pk = pl.pallas_call(
        kernel,
        out_shape=jax.ShapeDtypeStruct((G, PC, N), x.dtype),
        grid=(G,),
        in_specs=[
            pl.BlockSpec((None, PC, N), lambda g: (g, 0, 0)),   # packed x slab
            pl.BlockSpec((PC, 9 * PC), lambda g: (0, 0)),       # conv1 taps
            pl.BlockSpec((PC, 9 * PC), lambda g: (0, 0)),       # conv2 taps
            pl.BlockSpec((8, N), lambda g: (0, 0)),             # lane masks
        ],
        out_specs=pl.BlockSpec((None, PC, N), lambda g: (g, 0, 0)),
        input_output_aliases={0: 0},   # reuse the residual-input HBM buffer
        compiler_params=pltpu.CompilerParams(
            dimension_semantics=sem,
            vmem_limit_bytes=32 * 1024 * 1024,
        ),
        cost_estimate=pl.CostEstimate(
            flops=flops, transcendentals=2 * G * PC,
            bytes_accessed=bytes_accessed),
    )(xpk, w1m, w2m, masks)

    # Drop the halo ring and the lane padding (pure XLA slice).
    out = out_pk.reshape(B, C, N)[:, :, :hw_pad]
    return out.reshape(B, C, Hp, Wp)[:, :, 1:H + 1, 1:W + 1]


# --------------------------- pure-JAX reference ----------------------------- #

def _ref_res_block(x, w1, b1, w2, b2):
    def conv(v, w, b):
        vp = jnp.pad(v, ((0, 0), (0, 0), (1, 1), (1, 1)), mode="reflect")
        y = lax.conv_general_dilated(
            vp, w, window_strides=(1, 1), padding="VALID",
            dimension_numbers=("NCHW", "OIHW", "NCHW"))
        return y + b[None, :, None, None]

    def inorm(y):
        m = jnp.mean(y, axis=(2, 3), keepdims=True)
        v = jnp.mean((y - m) ** 2, axis=(2, 3), keepdims=True)
        return (y - m) / jnp.sqrt(v + EPS)

    y = jnp.maximum(inorm(conv(x, w1, b1)), 0.0)
    return x + inorm(conv(y, w2, b2))


# --------------------------------- main ------------------------------------ #

if __name__ == "__main__":
    B, C, H, W = 2, 4, 16, 16
    key = jax.random.PRNGKey(0)
    k1, k2, k3, k4, k5 = jax.random.split(key, 5)

    x = jax.random.normal(k1, (B, C, H, W), jnp.float32)
    # Conv2d(input_channel, input_channel, 3) parameters (deterministic init).
    w1 = 0.1 * jax.random.normal(k2, (C, C, 3, 3), jnp.float32)
    b1 = 0.1 * jax.random.normal(k3, (C,), jnp.float32)
    w2 = 0.1 * jax.random.normal(k4, (C, C, 3, 3), jnp.float32)
    b2 = 0.1 * jax.random.normal(k5, (C,), jnp.float32)

    out = res_block(x, w1, b1, w2, b2)
    jax.block_until_ready(out)

    ref = _ref_res_block(x, w1, b1, w2, b2)
    assert out.shape == (B, C, H, W)
    err = float(jnp.max(jnp.abs(out - ref)))
    assert jnp.allclose(out, ref, atol=1e-4, rtol=1e-4), err

    print("KERNEL_OK")
</pallas_src>

<mosaic_0001>
module attributes {stable_mosaic.version = 11 : i64} {
  func.func @kernel(%arg0: i32, %arg1: memref<1x8x384xf32, #tpu.memory_space<vmem>>, %arg2: memref<8x72xf32, #tpu.memory_space<vmem>>, %arg3: memref<8x72xf32, #tpu.memory_space<vmem>>, %arg4: memref<8x384xf32, #tpu.memory_space<vmem>>, %arg5: memref<1x8x384xf32, #tpu.memory_space<vmem>>) attributes {dimension_semantics = [#tpu.dimension_semantics<arbitrary>], iteration_bounds = array<i64: 1>, scalar_prefetch = 0 : i64, scratch_operands = 0 : i64, tpu.core_type = #tpu.core_type<tc>, window_params = [{transform_indices = @transform_0, window_bounds = array<i64: 1, 8, 384>}, {pipeline_mode = #tpu.pipeline_mode<synchronous>, transform_indices = @transform_1, window_bounds = array<i64: 8, 72>}, {pipeline_mode = #tpu.pipeline_mode<synchronous>, transform_indices = @transform_2, window_bounds = array<i64: 8, 72>}, {pipeline_mode = #tpu.pipeline_mode<synchronous>, transform_indices = @transform_3, window_bounds = array<i64: 8, 384>}, {transform_indices = @transform_4, window_bounds = array<i64: 1, 8, 384>}]} {
    %c0 = arith.constant 0 : index
    %c0_0 = arith.constant 0 : index
    %c0_1 = arith.constant 0 : index
    %0 = vector.load %arg1[%c0, %c0_0, %c0_1] : memref<1x8x384xf32, #tpu.memory_space<vmem>>, vector<1x8x384xf32>
    %1 = vector.shape_cast %0 : vector<1x8x384xf32> to vector<8x384xf32>
    %c0_2 = arith.constant 0 : index
    %c0_3 = arith.constant 0 : index
    %2 = vector.load %arg4[%c0_2, %c0_3] : memref<8x384xf32, #tpu.memory_space<vmem>>, vector<8x384xf32>
    %3 = vector.extract_strided_slice %2 {offsets = [0, 0], sizes = [1, 384], strides = [1, 1]} : vector<8x384xf32> to vector<1x384xf32>
    %4 = vector.extract_strided_slice %2 {offsets = [1, 0], sizes = [1, 384], strides = [1, 1]} : vector<8x384xf32> to vector<1x384xf32>
    %cst = arith.constant 5.000000e-01 : f32
    %5 = vector.broadcast %cst : f32 to vector<1x384xf32>
    %6 = arith.cmpf ogt, %4, %5 : vector<1x384xf32>
    %7 = vector.extract_strided_slice %2 {offsets = [2, 0], sizes = [1, 384], strides = [1, 1]} : vector<8x384xf32> to vector<1x384xf32>
    %cst_4 = arith.constant 5.000000e-01 : f32
    %8 = vector.broadcast %cst_4 : f32 to vector<1x384xf32>
    %9 = arith.cmpf ogt, %7, %8 : vector<1x384xf32>
    %10 = vector.extract_strided_slice %2 {offsets = [3, 0], sizes = [1, 384], strides = [1, 1]} : vector<8x384xf32> to vector<1x384xf32>
    %cst_5 = arith.constant 5.000000e-01 : f32
    %11 = vector.broadcast %cst_5 : f32 to vector<1x384xf32>
    %12 = arith.cmpf ogt, %10, %11 : vector<1x384xf32>
    %13 = vector.extract_strided_slice %2 {offsets = [4, 0], sizes = [1, 384], strides = [1, 1]} : vector<8x384xf32> to vector<1x384xf32>
    %cst_6 = arith.constant 5.000000e-01 : f32
    %14 = vector.broadcast %cst_6 : f32 to vector<1x384xf32>
    %15 = arith.cmpf ogt, %13, %14 : vector<1x384xf32>
    %c19_i32 = arith.constant 19 : i32
    %16 = tpu.dynamic_rotate %1 by %c19_i32 dim 1 : vector<8x384xf32>, i32 -> vector<8x384xf32>
    %c18_i32 = arith.constant 18 : i32
    %17 = tpu.dynamic_rotate %1 by %c18_i32 dim 1 : vector<8x384xf32>, i32 -> vector<8x384xf32>
    %c17_i32 = arith.constant 17 : i32
    %18 = tpu.dynamic_rotate %1 by %c17_i32 dim 1 : vector<8x384xf32>, i32 -> vector<8x384xf32>
    %c1_i32 = arith.constant 1 : i32
    %19 = tpu.dynamic_rotate %1 by %c1_i32 dim 1 : vector<8x384xf32>, i32 -> vector<8x384xf32>
    %c383_i32 = arith.constant 383 : i32
    %20 = tpu.dynamic_rotate %1 by %c383_i32 dim 1 : vector<8x384xf32>, i32 -> vector<8x384xf32>
    %c367_i32 = arith.constant 367 : i32
    %21 = tpu.dynamic_rotate %1 by %c367_i32 dim 1 : vector<8x384xf32>, i32 -> vector<8x384xf32>
    %c366_i32 = arith.constant 366 : i32
    %22 = tpu.dynamic_rotate %1 by %c366_i32 dim 1 : vector<8x384xf32>, i32 -> vector<8x384xf32>
    %c365_i32 = arith.constant 365 : i32
    %23 = tpu.dynamic_rotate %1 by %c365_i32 dim 1 : vector<8x384xf32>, i32 -> vector<8x384xf32>
    %24 = tpu.concatenate %16, %17, %18, %19, %1, %20, %21, %22, %23 in 0 : vector<8x384xf32>, vector<8x384xf32>, vector<8x384xf32>, vector<8x384xf32>, vector<8x384xf32>, vector<8x384xf32>, vector<8x384xf32>, vector<8x384xf32>, vector<8x384xf32> -> vector<72x384xf32>
    %c0_7 = arith.constant 0 : index
    %c0_8 = arith.constant 0 : index
    %25 = vector.load %arg2[%c0_7, %c0_8] : memref<8x72xf32, #tpu.memory_space<vmem>>, vector<8x72xf32>
    %cst_9 = arith.constant dense<0.000000e+00> : vector<8x384xf32>
    %26 = tpu.matmul %25, %24, %cst_9 {dimension_numbers = #tpu.dot_dimension_numbers<[1], [0], [0], [1], [0, 0, 1, 1], [], []>} : vector<8x72xf32>, vector<72x384xf32>, vector<8x384xf32> -> vector<8x384xf32>
    %27 = vector.broadcast %3 : vector<1x384xf32> to vector<8x384xf32>
    %28 = arith.mulf %26, %27 : vector<8x384xf32>
    %cst_10 = arith.constant dense<0.000000e+00> : vector<8xf32>
    %29 = vector.multi_reduction <add>, %28, %cst_10 [1] : vector<8x384xf32> to vector<8xf32>
    %30 = vector.shape_cast %29 : vector<8xf32> to vector<8x1xf32>
    %cst_11 = arith.constant 3.906250e-03 : f32
    %31 = vector.broadcast %cst_11 : f32 to vector<8x1xf32>
    %32 = arith.mulf %30, %31 : vector<8x1xf32>
    %33 = vector.broadcast %32 : vector<8x1xf32> to vector<8x384xf32>
    %34 = arith.subf %26, %33 : vector<8x384xf32>
    %35 = vector.broadcast %3 : vector<1x384xf32> to vector<8x384xf32>
    %36 = arith.mulf %34, %35 : vector<8x384xf32>
    %37 = arith.mulf %36, %36 : vector<8x384xf32>
    %cst_12 = arith.constant dense<0.000000e+00> : vector<8xf32>
    %38 = vector.multi_reduction <add>, %37, %cst_12 [1] : vector<8x384xf32> to vector<8xf32>
    %39 = vector.shape_cast %38 : vector<8xf32> to vector<8x1xf32>
    %cst_13 = arith.constant 3.906250e-03 : f32
    %40 = vector.broadcast %cst_13 : f32 to vector<8x1xf32>
    %41 = arith.mulf %39, %40 : vector<8x1xf32>
    %42 = vector.broadcast %32 : vector<8x1xf32> to vector<8x384xf32>
    %43 = arith.subf %26, %42 : vector<8x384xf32>
    %cst_14 = arith.constant 9.99999974E-6 : f32
    %44 = vector.broadcast %cst_14 : f32 to vector<8x1xf32>
    %45 = arith.addf %41, %44 : vector<8x1xf32>
    %46 = math.rsqrt %45 : vector<8x1xf32>
    %47 = vector.broadcast %46 : vector<8x1xf32> to vector<8x384xf32>
    %48 = arith.mulf %43, %47 : vector<8x384xf32>
    %cst_15 = arith.constant 0.000000e+00 : f32
    %49 = vector.broadcast %cst_15 : f32 to vector<8x384xf32>
    %50 = arith.maximumf %48, %49 : vector<8x384xf32>
    %c348_i32 = arith.constant 348 : i32
    %51 = tpu.dynamic_rotate %50 by %c348_i32 dim 1 : vector<8x384xf32>, i32 -> vector<8x384xf32>
    %52 = vector.shape_cast %6 : vector<1x384xi1> to vector<1x384xi1>
    %53 = vector.broadcast %52 : vector<1x384xi1> to vector<8x384xi1>
    %54 = arith.select %53, %51, %50 : vector<8x384xi1>, vector<8x384xf32>
    %c36_i32 = arith.constant 36 : i32
    %55 = tpu.dynamic_rotate %54 by %c36_i32 dim 1 : vector<8x384xf32>, i32 -> vector<8x384xf32>
    %56 = vector.shape_cast %9 : vector<1x384xi1> to vector<1x384xi1>
    %57 = vector.broadcast %56 : vector<1x384xi1> to vector<8x384xi1>
    %58 = arith.select %57, %55, %54 : vector<8x384xi1>, vector<8x384xf32>
    %c382_i32 = arith.constant 382 : i32
    %59 = tpu.dynamic_rotate %58 by %c382_i32 dim 1 : vector<8x384xf32>, i32 -> vector<8x384xf32>
    %60 = vector.shape_cast %12 : vector<1x384xi1> to vector<1x384xi1>
    %61 = vector.broadcast %60 : vector<1x384xi1> to vector<8x384xi1>
    %62 = arith.select %61, %59, %58 : vector<8x384xi1>, vector<8x384xf32>
    %c2_i32 = arith.constant 2 : i32
    %63 = tpu.dynamic_rotate %62 by %c2_i32 dim 1 : vector<8x384xf32>, i32 -> vector<8x384xf32>
    %64 = vector.shape_cast %15 : vector<1x384xi1> to vector<1x384xi1>
    %65 = vector.broadcast %64 : vector<1x384xi1> to vector<8x384xi1>
    %66 = arith.select %65, %63, %62 : vector<8x384xi1>, vector<8x384xf32>
    %c19_i32_16 = arith.constant 19 : i32
    %67 = tpu.dynamic_rotate %66 by %c19_i32_16 dim 1 : vector<8x384xf32>, i32 -> vector<8x384xf32>
    %c18_i32_17 = arith.constant 18 : i32
    %68 = tpu.dynamic_rotate %66 by %c18_i32_17 dim 1 : vector<8x384xf32>, i32 -> vector<8x384xf32>
    %c17_i32_18 = arith.constant 17 : i32
    %69 = tpu.dynamic_rotate %66 by %c17_i32_18 dim 1 : vector<8x384xf32>, i32 -> vector<8x384xf32>
    %c1_i32_19 = arith.constant 1 : i32
    %70 = tpu.dynamic_rotate %66 by %c1_i32_19 dim 1 : vector<8x384xf32>, i32 -> vector<8x384xf32>
    %c383_i32_20 = arith.constant 383 : i32
    %71 = tpu.dynamic_rotate %66 by %c383_i32_20 dim 1 : vector<8x384xf32>, i32 -> vector<8x384xf32>
    %c367_i32_21 = arith.constant 367 : i32
    %72 = tpu.dynamic_rotate %66 by %c367_i32_21 dim 1 : vector<8x384xf32>, i32 -> vector<8x384xf32>
    %c366_i32_22 = arith.constant 366 : i32
    %73 = tpu.dynamic_rotate %66 by %c366_i32_22 dim 1 : vector<8x384xf32>, i32 -> vector<8x384xf32>
    %c365_i32_23 = arith.constant 365 : i32
    %74 = tpu.dynamic_rotate %66 by %c365_i32_23 dim 1 : vector<8x384xf32>, i32 -> vector<8x384xf32>
    %75 = tpu.concatenate %67, %68, %69, %70, %66, %71, %72, %73, %74 in 0 : vector<8x384xf32>, vector<8x384xf32>, vector<8x384xf32>, vector<8x384xf32>, vector<8x384xf32>, vector<8x384xf32>, vector<8x384xf32>, vector<8x384xf32>, vector<8x384xf32> -> vector<72x384xf32>
    %c0_24 = arith.constant 0 : index
    %c0_25 = arith.constant 0 : index
    %76 = vector.load %arg3[%c0_24, %c0_25] : memref<8x72xf32, #tpu.memory_space<vmem>>, vector<8x72xf32>
    %cst_26 = arith.constant dense<0.000000e+00> : vector<8x384xf32>
    %77 = tpu.matmul %76, %75, %cst_26 {dimension_numbers = #tpu.dot_dimension_numbers<[1], [0], [0], [1], [0, 0, 1, 1], [], []>} : vector<8x72xf32>, vector<72x384xf32>, vector<8x384xf32> -> vector<8x384xf32>
    %78 = vector.broadcast %3 : vector<1x384xf32> to vector<8x384xf32>
    %79 = arith.mulf %77, %78 : vector<8x384xf32>
    %cst_27 = arith.constant dense<0.000000e+00> : vector<8xf32>
    %80 = vector.multi_reduction <add>, %79, %cst_27 [1] : vector<8x384xf32> to vector<8xf32>
    %81 = vector.shape_cast %80 : vector<8xf32> to vector<8x1xf32>
    %cst_28 = arith.constant 3.906250e-03 : f32
    %82 = vector.broadcast %cst_28 : f32 to vector<8x1xf32>
    %83 = arith.mulf %81, %82 : vector<8x1xf32>
    %84 = vector.broadcast %83 : vector<8x1xf32> to vector<8x384xf32>
    %85 = arith.subf %77, %84 : vector<8x384xf32>
    %86 = vector.broadcast %3 : vector<1x384xf32> to vector<8x384xf32>
    %87 = arith.mulf %85, %86 : vector<8x384xf32>
    %88 = arith.mulf %87, %87 : vector<8x384xf32>
    %cst_29 = arith.constant dense<0.000000e+00> : vector<8xf32>
    %89 = vector.multi_reduction <add>, %88, %cst_29 [1] : vector<8x384xf32> to vector<8xf32>
    %90 = vector.shape_cast %89 : vector<8xf32> to vector<8x1xf32>
    %cst_30 = arith.constant 3.906250e-03 : f32
    %91 = vector.broadcast %cst_30 : f32 to vector<8x1xf32>
    %92 = arith.mulf %90, %91 : vector<8x1xf32>
    %93 = vector.broadcast %83 : vector<8x1xf32> to vector<8x384xf32>
    %94 = arith.subf %77, %93 : vector<8x384xf32>
    %cst_31 = arith.constant 9.99999974E-6 : f32
    %95 = vector.broadcast %cst_31 : f32 to vector<8x1xf32>
    %96 = arith.addf %92, %95 : vector<8x1xf32>
    %97 = math.rsqrt %96 : vector<8x1xf32>
    %98 = vector.broadcast %97 : vector<8x1xf32> to vector<8x384xf32>
    %99 = arith.mulf %94, %98 : vector<8x384xf32>
    %100 = arith.addf %1, %99 : vector<8x384xf32>
    %c0_32 = arith.constant 0 : index
    %c0_33 = arith.constant 0 : index
    %c0_34 = arith.constant 0 : index
    %101 = vector.load %arg5[%c0_32, %c0_33, %c0_34] : memref<1x8x384xf32, #tpu.memory_space<vmem>>, vector<1x8x384xf32>
    %102 = vector.shape_cast %101 : vector<1x8x384xf32> to vector<8x384xf32>
    %103 = vector.shape_cast %100 : vector<8x384xf32> to vector<1x8x384xf32>
    tpu.vector_store %arg5[%c0_32, %c0_33, %c0_34], %103 {strides = array<i32>} : memref<1x8x384xf32, #tpu.memory_space<vmem>>, vector<1x8x384xf32>,
    return
  }
  func.func @transform_0(%arg0: i32) -> (i32, i32, i32) {
    %c0_i32 = arith.constant 0 : i32
    %c0_i32_0 = arith.constant 0 : i32
    %c0_i32_1 = arith.constant 0 : i32
    return %arg0, %c0_i32, %c0_i32_0 : i32, i32, i32
  }
  func.func @transform_1(%arg0: i32) -> (i32, i32) {
    %c0_i32 = arith.constant 0 : i32
    %c0_i32_0 = arith.constant 0 : i32
    %c0_i32_1 = arith.constant 0 : i32
    return %c0_i32, %c0_i32_0 : i32, i32
  }
  func.func @transform_2(%arg0: i32) -> (i32, i32) {
    %c0_i32 = arith.constant 0 : i32
    %c0_i32_0 = arith.constant 0 : i32
    %c0_i32_1 = arith.constant 0 : i32
    return %c0_i32, %c0_i32_0 : i32, i32
  }
  func.func @transform_3(%arg0: i32) -> (i32, i32) {
    %c0_i32 = arith.constant 0 : i32
    %c0_i32_0 = arith.constant 0 : i32
    %c0_i32_1 = arith.constant 0 : i32
    return %c0_i32, %c0_i32_0 : i32, i32
  }
  func.func @transform_4(%arg0: i32) -> (i32, i32, i32) {
    %c0_i32 = arith.constant 0 : i32
    %c0_i32_0 = arith.constant 0 : i32
    %c0_i32_1 = arith.constant 0 : i32
    return %arg0, %c0_i32, %c0_i32_0 : i32, i32, i32
  }
}

</mosaic_0001>

<llo_original>
// kernel: res_block.1
$region0: #{res_block.1}
  #allocation0 [shape = 'u32[]', space=smem, size = 0x4, offset = 0x4, fixed_abs, tag = 'smem constant byte address 0x4 - core index']
  #allocation1 [shape = 'u32[144,128]{1,0:T(1,128)}', space=vmem, size = 0x12000, scoped, tag = 'internal scratch']
  %s0 = inlined_call_operand.vmem [shape: f32[1,8,384], index: 0, kind: input, shape index: {}, may-alias: {0,4}]
  %s1 = inlined_call_operand.vmem [shape: f32[8,72], index: 1, kind: input, shape index: {}]
  %s2 = inlined_call_operand.vmem [shape: f32[8,72], index: 2, kind: input, shape index: {}]
  %s3 = inlined_call_operand.vmem [shape: f32[8,384], index: 3, kind: input, shape index: {}]
  %s4 = inlined_call_operand.vmem [shape: f32[1,8,384], index: 4, kind: output, shape index: {}, may-alias: {0,4}]
  %s5 = sld [smem:[#allocation0]]
  $region26: #{res_block.1} parent=0
    _
  %s7 = ssub.s32 1, %s5
  %s8 = scalar_select 0, %s7, %s5
  // Predicated region
  $region2: #{res_block.1} parent=0 // pred_check
    _
  $region3: #{res_block.1} parent=0 // pred_check_branch
    %10 = sbr.rel (0) target = $region5
  $region4: #{res_block.1} parent=0 // pred_region
    _
  $region5: #{res_block.1} parent=0 // pred_fallthru
    _
  // Predicated region
  $region6: #{res_block.1} parent=0 // pred_check
    _
  $region7: #{res_block.1} parent=0 // pred_check_branch
    %12 = sbr.rel (0) target = $region9
  $region8: #{res_block.1} parent=0 // pred_region
    _
  $region9: #{res_block.1} parent=0 // pred_fallthru
    _
  // Predicated region
  $region10: #{res_block.1} parent=0 // pred_check
    _
  $region11: #{res_block.1} parent=0 // pred_check_branch
    %14 = sbr.rel (0) target = $region13
  $region12: #{res_block.1} parent=0 // pred_region
    _
  $region13: #{res_block.1} parent=0 // pred_fallthru
    _
  // Predicated region
  $region14: #{res_block.1} parent=0 // pred_check
    _
  $region15: #{res_block.1} parent=0 // pred_check_branch
    %16 = sbr.rel (0) target = $region17
  $region16: #{res_block.1} parent=0 // pred_region
    _
  $region17: #{res_block.1} parent=0 // pred_fallthru
    _
  %v17 = vld [vmem:[%s0] sm:$0xff]
  %v18 = vld [vmem:[%s0 + $0x8] sm:$0xff]
  %v19 = vld [vmem:[%s0 + $0x10] sm:$0xff]
  %v20 = vld [vmem:[%s3] sm:$0xff]
  %v21 = vld [vmem:[%s3 + $0x8] sm:$0xff]
  %v22 = vld [vmem:[%s3 + $0x10] sm:$0xff]
  %vm23 = vcmp.gt.f32.partialorder %v20, 0.5
  %vm24 = vcmp.gt.f32.partialorder %v21, 0.5
  %vm25 = vcmp.gt.f32.partialorder %v22, 0.5
  %26 = vrot.lane.b32.xlu0 %v17, 19
  %v27 = vpop.permute.xlu0 %26
  %28 = vrot.lane.b32.xlu0 %v18, 19
  %v29 = vpop.permute.xlu0 %28
  %30 = vrot.lane.b32.xlu0 %v19, 19
  %v31 = vpop.permute.xlu0 %30
  %v32 = vlaneseq
  %v33 = vand.u32 %v32, 127
  %vm34 = vcmp.lt.s32.totalorder %v33, 19
  %v35 = vsel %vm34, %v29, %v31
  %v36 = vsel %vm34, %v27, %v29
  %v37 = vsel %vm34, %v31, %v27
  %38 = vrot.lane.b32.xlu0 %v17, 18
  %v39 = vpop.permute.xlu0 %38
  %40 = vrot.lane.b32.xlu0 %v18, 18
  %v41 = vpop.permute.xlu0 %40
  %42 = vrot.lane.b32.xlu0 %v19, 18
  %v43 = vpop.permute.xlu0 %42
  %vm44 = vcmp.lt.s32.totalorder %v33, 18
  %v45 = vsel %vm44, %v41, %v43
  %v46 = vsel %vm44, %v39, %v41
  %v47 = vsel %vm44, %v43, %v39
  %48 = vrot.lane.b32.xlu0 %v17, 17
  %v49 = vpop.permute.xlu0 %48
  %50 = vrot.lane.b32.xlu0 %v18, 17
  %v51 = vpop.permute.xlu0 %50
  %52 = vrot.lane.b32.xlu0 %v19, 17
  %v53 = vpop.permute.xlu0 %52
  %vm54 = vcmp.lt.s32.totalorder %v33, 17
  %v55 = vsel %vm54, %v51, %v53
  %v56 = vsel %vm54, %v49, %v51
  %v57 = vsel %vm54, %v53, %v49
  %58 = vrot.lane.b32.xlu0 %v17, 1
  %v59 = vpop.permute.xlu0 %58
  %60 = vrot.lane.b32.xlu0 %v18, 1
  %v61 = vpop.permute.xlu0 %60
  %62 = vrot.lane.b32.xlu0 %v19, 1
  %v63 = vpop.permute.xlu0 %62
  %vm64 = vcmp.lt.s32.totalorder %v33, 1
  %v65 = vsel %vm64, %v61, %v63
  %v66 = vsel %vm64, %v59, %v61
  %v67 = vsel %vm64, %v63, %v59
  %68 = vrot.lane.b32.xlu0 %v17, 127
  %v69 = vpop.permute.xlu0 %68
  %70 = vrot.lane.b32.xlu0 %v18, 127
  %v71 = vpop.permute.xlu0 %70
  %72 = vrot.lane.b32.xlu0 %v19, 127
  %v73 = vpop.permute.xlu0 %72
  %vm74 = vcmp.lt.s32.totalorder %v33, 127
  %v75 = vsel %vm74, %v71, %v73
  %v76 = vsel %vm74, %v69, %v71
  %v77 = vsel %vm74, %v73, %v69
  %78 = vrot.lane.b32.xlu0 %v17, 111
  %v79 = vpop.permute.xlu0 %78
  %80 = vrot.lane.b32.xlu0 %v18, 111
  %v81 = vpop.permute.xlu0 %80
  %82 = vrot.lane.b32.xlu0 %v19, 111
  %v83 = vpop.permute.xlu0 %82
  %vm84 = vcmp.lt.s32.totalorder %v33, 111
  %v85 = vsel %vm84, %v81, %v83
  %v86 = vsel %vm84, %v79, %v81
  %v87 = vsel %vm84, %v83, %v79
  %88 = vrot.lane.b32.xlu0 %v17, 110
  %v89 = vpop.permute.xlu0 %88
  %90 = vrot.lane.b32.xlu0 %v18, 110
  %v91 = vpop.permute.xlu0 %90
  %92 = vrot.lane.b32.xlu0 %v19, 110
  %v93 = vpop.permute.xlu0 %92
  %vm94 = vcmp.lt.s32.totalorder %v33, 110
  %v95 = vsel %vm94, %v91, %v93
  %v96 = vsel %vm94, %v89, %v91
  %v97 = vsel %vm94, %v93, %v89
  %98 = vrot.lane.b32.xlu0 %v17, 109
  %v99 = vpop.permute.xlu0 %98
  %100 = vrot.lane.b32.xlu0 %v18, 109
  %v101 = vpop.permute.xlu0 %100
  %102 = vrot.lane.b32.xlu0 %v19, 109
  %v103 = vpop.permute.xlu0 %102
  %vm104 = vcmp.lt.s32.totalorder %v33, 109
  %v105 = vsel %vm104, %v101, %v103
  %v106 = vsel %vm104, %v99, %v101
  %v107 = vsel %vm104, %v103, %v99
  %v108 = vld [vmem:[%s1] sm:$0xff]
  %vm109 = vcmask 588800
  %v111 = vsel %vm109, %v108, 0
  %113 = vmatprep.subr.mxu0 0.0
  %114 = vmatpush1.msra.mxu0 0.0
  %115 = vmatprep.subr.mxu0 0.0
  %116 = vmatpush1.msra.mxu0 0.0
  %117 = vmatprep.subr.mxu0 0.0
  %118 = vmatpush1.msra.mxu0 0.0
  %119 = vmatprep.subr.mxu0 0.0
  %120 = vmatpush1.msra.mxu0 0.0
  %121 = vmatprep.subr.mxu0 0.0
  %122 = vmatpush1.msra.mxu0 0.0
  %123 = vmatprep.subr.mxu0 0.0
  %124 = vmatpush1.msra.mxu0 0.0
  %125 = vmatprep.subr.mxu0 0.0
  %126 = vmatpush1.msra.mxu0 0.0
  %127 = vmatprep.subr.mxu0 %v105
  %128 = vmatpush1.msra.mxu0 %v106
  %129 = vmatprep.subr.mxu0 %v95
  %130 = vmatpush1.msra.mxu0 %v96
  %131 = vmatprep.subr.mxu0 %v85
  %132 = vmatpush1.msra.mxu0 %v86
  %133 = vmatprep.subr.mxu0 %v75
  %134 = vmatpush1.msra.mxu0 %v76
  %135 = vmatprep.subr.mxu0 %v18
  %136 = vmatpush1.msra.mxu0 %v17
  %137 = vmatprep.subr.mxu0 %v66
  %138 = vmatpush1.msra.mxu0 %v67
  %139 = vmatprep.subr.mxu0 %v56
  %140 = vmatpush1.msra.mxu0 %v57
  %141 = vmatprep.subr.mxu0 %v46
  %142 = vmatpush1.msra.mxu0 %v47
  %143 = vmatprep.subr.mxu0 %v36
  %144 = vmatpush1.msra.mxu0 %v37
  %145 = vmatprep.subr.mxu0 0.0
  %146 = vmatpush2.msra.mxu0 0.0
  %147 = vmatprep.subr.mxu0 0.0
  %148 = vmatpush2.msra.mxu0 0.0
  %149 = vmatprep.subr.mxu0 0.0
  %150 = vmatpush2.msra.mxu0 0.0
  %151 = vmatprep.subr.mxu0 0.0
  %152 = vmatpush2.msra.mxu0 0.0
  %153 = vmatprep.subr.mxu0 0.0
  %154 = vmatpush2.msra.mxu0 0.0
  %155 = vmatprep.subr.mxu0 0.0
  %156 = vmatpush2.msra.mxu0 0.0
  %157 = vmatprep.subr.mxu0 0.0
  %158 = vmatpush2.msra.mxu0 0.0
  %159 = vmatprep.subr.mxu0 0.0
  %160 = vmatpush2.msra.mxu0 0.0
  %161 = vmatprep.subr.mxu0 0.0
  %162 = vmatpush2.msra.mxu0 0.0
  %163 = vmatprep.subr.mxu0 0.0
  %164 = vmatpush2.msra.mxu0 0.0
  %165 = vmatprep.subr.mxu0 0.0
  %166 = vmatpush2.msra.mxu0 0.0
  %167 = vmatprep.subr.mxu0 0.0
  %168 = vmatpush2.msra.mxu0 0.0
  %169 = vmatprep.subr.mxu0 0.0
  %170 = vmatpush2.msra.mxu0 0.0
  %171 = vmatprep.subr.mxu0 0.0
  %172 = vmatpush2.msra.mxu0 0.0
  %173 = vmatprep.subr.mxu0 0.0
  %174 = vmatpush2.msra.mxu0 0.0
  %175 = vmatprep.subr.mxu0 0.0
  %176 = vmatpush2.msra.mxu0 0.0
  %177 = vmatprep.mubr.f32.mxu0 0.0
  %178 = vmatmul.mubr.f32.gmra.mxu0 %v111
  %v179 = vpop.f32.mrf.mxu0
  %v180 = vadd.f32 0.0, %v179
  %v181 = vpop.f32.mrf.mxu0
  %v182 = vadd.f32 0.0, %v181
  %183 = vdwg.mxu0
  %184 = vmatprep.subr.mxu0 0.0
  %185 = vmatpush1.msra.mxu0 0.0
  %186 = vmatprep.subr.mxu0 0.0
  %187 = vmatpush1.msra.mxu0 0.0
  %188 = vmatprep.subr.mxu0 0.0
  %189 = vmatpush1.msra.mxu0 0.0
  %190 = vmatprep.subr.mxu0 0.0
  %191 = vmatpush1.msra.mxu0 0.0
  %192 = vmatprep.subr.mxu0 0.0
  %193 = vmatpush1.msra.mxu0 0.0
  %194 = vmatprep.subr.mxu0 0.0
  %195 = vmatpush1.msra.mxu0 0.0
  %196 = vmatprep.subr.mxu0 0.0
  %197 = vmatpush1.msra.mxu0 0.0
  %198 = vmatprep.subr.mxu0 0.0
  %199 = vmatpush1.msra.mxu0 %v107
  %200 = vmatprep.subr.mxu0 0.0
  %201 = vmatpush1.msra.mxu0 %v97
  %202 = vmatprep.subr.mxu0 0.0
  %203 = vmatpush1.msra.mxu0 %v87
  %204 = vmatprep.subr.mxu0 0.0
  %205 = vmatpush1.msra.mxu0 %v77
  %206 = vmatprep.subr.mxu0 0.0
  %207 = vmatpush1.msra.mxu0 %v19
  %208 = vmatprep.subr.mxu0 0.0
  %209 = vmatpush1.msra.mxu0 %v65
  %210 = vmatprep.subr.mxu0 0.0
  %211 = vmatpush1.msra.mxu0 %v55
  %212 = vmatprep.subr.mxu0 0.0
  %213 = vmatpush1.msra.mxu0 %v45
  %214 = vmatprep.subr.mxu0 0.0
  %215 = vmatpush1.msra.mxu0 %v35
  %216 = vmatprep.subr.mxu0 0.0
  %217 = vmatpush2.msra.mxu0 0.0
  %218 = vmatprep.subr.mxu0 0.0
  %219 = vmatpush2.msra.mxu0 0.0
  %220 = vmatprep.subr.mxu0 0.0
  %221 = vmatpush2.msra.mxu0 0.0
  %222 = vmatprep.subr.mxu0 0.0
  %223 = vmatpush2.msra.mxu0 0.0
  %224 = vmatprep.subr.mxu0 0.0
  %225 = vmatpush2.msra.mxu0 0.0
  %226 = vmatprep.subr.mxu0 0.0
  %227 = vmatpush2.msra.mxu0 0.0
  %228 = vmatprep.subr.mxu0 0.0
  %229 = vmatpush2.msra.mxu0 0.0
  %230 = vmatprep.subr.mxu0 0.0
  %231 = vmatpush2.msra.mxu0 0.0
  %232 = vmatprep.subr.mxu0 0.0
  %233 = vmatpush2.msra.mxu0 0.0
  %234 = vmatprep.subr.mxu0 0.0
  %235 = vmatpush2.msra.mxu0 0.0
  %236 = vmatprep.subr.mxu0 0.0
  %237 = vmatpush2.msra.mxu0 0.0
  %238 = vmatprep.subr.mxu0 0.0
  %239 = vmatpush2.msra.mxu0 0.0
  %240 = vmatprep.subr.mxu0 0.0
  %241 = vmatpush2.msra.mxu0 0.0
  %242 = vmatprep.subr.mxu0 0.0
  %243 = vmatpush2.msra.mxu0 0.0
  %244 = vmatprep.subr.mxu0 0.0
  %245 = vmatpush2.msra.mxu0 0.0
  %246 = vmatprep.subr.mxu0 0.0
  %247 = vmatpush2.msra.mxu0 0.0
  %248 = vmatprep.mubr.f32.mxu0 0.0
  %249 = vmatmul.mubr.f32.gmra.mxu0 %v111
  %v250 = vpop.f32.mrf.mxu0
  %v251 = vadd.f32 0.0, %v250
  %v252 = vpop.f32.mrf.mxu0
  %253 = vdwg.mxu0
  %v254 = vlaneseq
  %v255 = vshrl.u32 %v254, 7
  %v256 = vsub.s32 0, %v255
  %v257 = vrot.slane %v20, %v256
  %v258 = vlaneseq
  %v259 = vshrl.u32 %v258, 7
  %v260 = vsub.s32 0, %v259
  %v261 = vrot.slane %v21, %v260
  %v262 = vlaneseq
  %v263 = vshrl.u32 %v262, 7
  %v264 = vsub.s32 0, %v263
  %v265 = vrot.slane %v22, %v264
  %v266 = vmul.f32 %v180, %v257
  %v267 = vmul.f32 %v182, %v261
  %v268 = vmul.f32 %v251, %v265
  %v269 = vadd.f32 %v266, %v267
  %v270 = vadd.f32 %v269, %v268
  %271 = vadd.xlane.f32.xlu0 %v270
  %v272 = vpop.xlane.xlu0 %271
  %v273 = vmul.f32 %v272, 0.00390625
  %v274 = vsub.f32 %v180, %v273
  %v275 = vsub.f32 %v182, %v273
  %v276 = vsub.f32 %v251, %v273
  %v277 = vmul.f32 %v274, %v257
  %v278 = vmul.f32 %v275, %v261
  %v279 = vmul.f32 %v276, %v265
  %v280 = vmul.f32 %v277, %v277
  %v281 = vmul.f32 %v278, %v278
  %v282 = vmul.f32 %v279, %v279
  %v283 = vadd.f32 %v280, %v281
  %v284 = vadd.f32 %v283, %v282
  %285 = vadd.xlane.f32.xlu0 %v284
  %v286 = vpop.xlane.xlu0 %285
  %v287 = vmul.f32 %v286, 0.00390625
  %v288 = vadd.f32 %v287, 1e-05
  %v289 = vrsqrt.pop %v288
  %v290 = vmul.f32 %v274, %v289
  %v291 = vmul.f32 %v275, %v289
  %v292 = vmul.f32 %v276, %v289
  %v293 = vmax.f32 %v290, 0.0
  %v294 = vmax.f32 %v291, 0.0
  %v295 = vmax.f32 %v292, 0.0
  %296 = vrot.lane.b32.xlu0 %v293, 92
  %v297 = vpop.permute.xlu0 %296
  %298 = vrot.lane.b32.xlu0 %v294, 92
  %v299 = vpop.permute.xlu0 %298
  %300 = vrot.lane.b32.xlu0 %v295, 92
  %v301 = vpop.permute.xlu0 %300
  %vm302 = vcmp.lt.s32.totalorder %v33, 92
  %v303 = vsel %vm302, %v299, %v301
  %v304 = vsel %vm302, %v297, %v299
  %v305 = vsel %vm302, %v301, %v297
  %v306 = vsel %vm23, 1, 0
  %v307 = vsel %vm24, 1, 0
  %v308 = vsel %vm25, 1, 0
  %v309 = vlaneseq
  %v310 = vshrl.u32 %v309, 7
  %v311 = vsub.s32 1, %v310
  %v312 = vrot.slane %v306, %v311
  %v313 = vlaneseq
  %v314 = vshrl.u32 %v313, 7
  %v315 = vsub.s32 1, %v314
  %v316 = vrot.slane %v307, %v315
  %v317 = vlaneseq
  %v318 = vshrl.u32 %v317, 7
  %v319 = vsub.s32 1, %v318
  %v320 = vrot.slane %v308, %v319
  %vm321 = vcmp.eq.s32.totalorder %v312, 1
  %vm322 = vcmp.eq.s32.totalorder %v316, 1
  %vm323 = vcmp.eq.s32.totalorder %v320, 1
  %v324 = vsel %vm321, %v304, %v293
  %v325 = vsel %vm322, %v303, %v294
  %v326 = vsel %vm323, %v305, %v295
  %327 = vrot.lane.b32.xlu0 %v324, 36
  %v328 = vpop.permute.xlu0 %327
  %329 = vrot.lane.b32.xlu0 %v325, 36
  %v330 = vpop.permute.xlu0 %329
  %331 = vrot.lane.b32.xlu0 %v326, 36
  %v332 = vpop.permute.xlu0 %331
  %vm333 = vcmp.lt.s32.totalorder %v33, 36
  %v334 = vsel %vm333, %v330, %v332
  %v335 = vsel %vm333, %v328, %v330
  %v336 = vsel %vm333, %v332, %v328
  %v337 = vlaneseq
  %v338 = vshrl.u32 %v337, 7
  %v339 = vsub.s32 2, %v338
  %v340 = vrot.slane %v306, %v339
  %v341 = vlaneseq
  %v342 = vshrl.u32 %v341, 7
  %v343 = vsub.s32 2, %v342
  %v344 = vrot.slane %v307, %v343
  %v345 = vlaneseq
  %v346 = vshrl.u32 %v345, 7
  %v347 = vsub.s32 2, %v346
  %v348 = vrot.slane %v308, %v347
  %vm349 = vcmp.eq.s32.totalorder %v340, 1
  %vm350 = vcmp.eq.s32.totalorder %v344, 1
  %vm351 = vcmp.eq.s32.totalorder %v348, 1
  %v352 = vsel %vm349, %v336, %v324
  %v353 = vsel %vm350, %v335, %v325
  %v354 = vsel %vm351, %v334, %v326
  %355 = vrot.lane.b32.xlu0 %v352, 126
  %v356 = vpop.permute.xlu0 %355
  %357 = vrot.lane.b32.xlu0 %v353, 126
  %v358 = vpop.permute.xlu0 %357
  %359 = vrot.lane.b32.xlu0 %v354, 126
  %v360 = vpop.permute.xlu0 %359
  %vm361 = vcmp.lt.s32.totalorder %v33, 126
  %v362 = vsel %vm361, %v358, %v360
  %v363 = vsel %vm361, %v356, %v358
  %v364 = vsel %vm361, %v360, %v356
  %v365 = vlaneseq
  %v366 = vshrl.u32 %v365, 7
  %v367 = vsub.s32 3, %v366
  %v368 = vrot.slane %v306, %v367
  %v369 = vlaneseq
  %v370 = vshrl.u32 %v369, 7
  %v371 = vsub.s32 3, %v370
  %v372 = vrot.slane %v307, %v371
  %v373 = vlaneseq
  %v374 = vshrl.u32 %v373, 7
  %v375 = vsub.s32 3, %v374
  %v376 = vrot.slane %v308, %v375
  %vm377 = vcmp.eq.s32.totalorder %v368, 1
  %vm378 = vcmp.eq.s32.totalorder %v372, 1
  %vm379 = vcmp.eq.s32.totalorder %v376, 1
  %v380 = vsel %vm377, %v363, %v352
  %v381 = vsel %vm378, %v362, %v353
  %v382 = vsel %vm379, %v364, %v354
  %383 = vrot.lane.b32.xlu0 %v380, 2
  %v384 = vpop.permute.xlu0 %383
  %385 = vrot.lane.b32.xlu0 %v381, 2
  %v386 = vpop.permute.xlu0 %385
  %387 = vrot.lane.b32.xlu0 %v382, 2
  %v388 = vpop.permute.xlu0 %387
  %vm389 = vcmp.lt.s32.totalorder %v33, 2
  %v390 = vsel %vm389, %v386, %v388
  %v391 = vsel %vm389, %v384, %v386
  %v392 = vsel %vm389, %v388, %v384
  %v393 = vlaneseq
  %v394 = vshrl.u32 %v393, 7
  %v395 = vsub.s32 4, %v394
  %v396 = vrot.slane %v306, %v395
  %v397 = vlaneseq
  %v398 = vshrl.u32 %v397, 7
  %v399 = vsub.s32 4, %v398
  %v400 = vrot.slane %v307, %v399
  %v401 = vlaneseq
  %v402 = vshrl.u32 %v401, 7
  %v403 = vsub.s32 4, %v402
  %v404 = vrot.slane %v308, %v403
  %vm405 = vcmp.eq.s32.totalorder %v396, 1
  %vm406 = vcmp.eq.s32.totalorder %v400, 1
  %vm407 = vcmp.eq.s32.totalorder %v404, 1
  %v408 = vsel %vm405, %v392, %v380
  %v409 = vsel %vm406, %v391, %v381
  %v410 = vsel %vm407, %v390, %v382
  %411 = vrot.lane.b32.xlu0 %v408, 19
  %v412 = vpop.permute.xlu0 %411
  %413 = vrot.lane.b32.xlu0 %v409, 19
  %v414 = vpop.permute.xlu0 %413
  %415 = vrot.lane.b32.xlu0 %v410, 19
  %v416 = vpop.permute.xlu0 %415
  %v417 = vsel %vm34, %v414, %v416
  %v418 = vsel %vm34, %v412, %v414
  %v419 = vsel %vm34, %v416, %v412
  %420 = vrot.lane.b32.xlu0 %v408, 18
  %v421 = vpop.permute.xlu0 %420
  %422 = vrot.lane.b32.xlu0 %v409, 18
  %v423 = vpop.permute.xlu0 %422
  %424 = vrot.lane.b32.xlu0 %v410, 18
  %v425 = vpop.permute.xlu0 %424
  %v426 = vsel %vm44, %v423, %v425
  %v427 = vsel %vm44, %v421, %v423
  %v428 = vsel %vm44, %v425, %v421
  %429 = vrot.lane.b32.xlu0 %v408, 17
  %v430 = vpop.permute.xlu0 %429
  %431 = vrot.lane.b32.xlu0 %v409, 17
  %v432 = vpop.permute.xlu0 %431
  %433 = vrot.lane.b32.xlu0 %v410, 17
  %v434 = vpop.permute.xlu0 %433
  %v435 = vsel %vm54, %v432, %v434
  %v436 = vsel %vm54, %v430, %v432
  %v437 = vsel %vm54, %v434, %v430
  %438 = vrot.lane.b32.xlu0 %v408, 1
  %v439 = vpop.permute.xlu0 %438
  %440 = vrot.lane.b32.xlu0 %v409, 1
  %v441 = vpop.permute.xlu0 %440
  %442 = vrot.lane.b32.xlu0 %v410, 1
  %v443 = vpop.permute.xlu0 %442
  %v444 = vsel %vm64, %v441, %v443
  %v445 = vsel %vm64, %v439, %v441
  %v446 = vsel %vm64, %v443, %v439
  %447 = vrot.lane.b32.xlu0 %v408, 127
  %v448 = vpop.permute.xlu0 %447
  %449 = vrot.lane.b32.xlu0 %v409, 127
  %v450 = vpop.permute.xlu0 %449
  %451 = vrot.lane.b32.xlu0 %v410, 127
  %v452 = vpop.permute.xlu0 %451
  %v453 = vsel %vm74, %v450, %v452
  %v454 = vsel %vm74, %v448, %v450
  %v455 = vsel %vm74, %v452, %v448
  %456 = vrot.lane.b32.xlu0 %v408, 111
  %v457 = vpop.permute.xlu0 %456
  %458 = vrot.lane.b32.xlu0 %v409, 111
  %v459 = vpop.permute.xlu0 %458
  %460 = vrot.lane.b32.xlu0 %v410, 111
  %v461 = vpop.permute.xlu0 %460
  %v462 = vsel %vm84, %v459, %v461
  %v463 = vsel %vm84, %v457, %v459
  %v464 = vsel %vm84, %v461, %v457
  %465 = vrot.lane.b32.xlu0 %v408, 110
  %v466 = vpop.permute.xlu0 %465
  %467 = vrot.lane.b32.xlu0 %v409, 110
  %v468 = vpop.permute.xlu0 %467
  %469 = vrot.lane.b32.xlu0 %v410, 110
  %v470 = vpop.permute.xlu0 %469
  %v471 = vsel %vm94, %v468, %v470
  %v472 = vsel %vm94, %v466, %v468
  %v473 = vsel %vm94, %v470, %v466
  %474 = vrot.lane.b32.xlu0 %v408, 109
  %v475 = vpop.permute.xlu0 %474
  %476 = vrot.lane.b32.xlu0 %v409, 109
  %v477 = vpop.permute.xlu0 %476
  %478 = vrot.lane.b32.xlu0 %v410, 109
  %v479 = vpop.permute.xlu0 %478
  %v480 = vsel %vm104, %v477, %v479
  %v481 = vsel %vm104, %v475, %v477
  %v482 = vsel %vm104, %v479, %v475
  %v483 = vld [vmem:[%s2] sm:$0xff]
  %v485 = vsel %vm109, %v483, 0
  %487 = vmatprep.subr.mxu0 0.0
  %488 = vmatpush1.msra.mxu0 0.0
  %489 = vmatprep.subr.mxu0 0.0
  %490 = vmatpush1.msra.mxu0 0.0
  %491 = vmatprep.subr.mxu0 0.0
  %492 = vmatpush1.msra.mxu0 0.0
  %493 = vmatprep.subr.mxu0 0.0
  %494 = vmatpush1.msra.mxu0 0.0
  %495 = vmatprep.subr.mxu0 0.0
  %496 = vmatpush1.msra.mxu0 0.0
  %497 = vmatprep.subr.mxu0 0.0
  %498 = vmatpush1.msra.mxu0 0.0
  %499 = vmatprep.subr.mxu0 0.0
  %500 = vmatpush1.msra.mxu0 0.0
  %501 = vmatprep.subr.mxu0 %v480
  %502 = vmatpush1.msra.mxu0 %v481
  %503 = vmatprep.subr.mxu0 %v471
  %504 = vmatpush1.msra.mxu0 %v472
  %505 = vmatprep.subr.mxu0 %v462
  %506 = vmatpush1.msra.mxu0 %v463
  %507 = vmatprep.subr.mxu0 %v453
  %508 = vmatpush1.msra.mxu0 %v454
  %509 = vmatprep.subr.mxu0 %v409
  %510 = vmatpush1.msra.mxu0 %v408
  %511 = vmatprep.subr.mxu0 %v445
  %512 = vmatpush1.msra.mxu0 %v446
  %513 = vmatprep.subr.mxu0 %v436
  %514 = vmatpush1.msra.mxu0 %v437
  %515 = vmatprep.subr.mxu0 %v427
  %516 = vmatpush1.msra.mxu0 %v428
  %517 = vmatprep.subr.mxu0 %v418
  %518 = vmatpush1.msra.mxu0 %v419
  %519 = vmatprep.subr.mxu0 0.0
  %520 = vmatpush2.msra.mxu0 0.0
  %521 = vmatprep.subr.mxu0 0.0
  %522 = vmatpush2.msra.mxu0 0.0
  %523 = vmatprep.subr.mxu0 0.0
  %524 = vmatpush2.msra.mxu0 0.0
  %525 = vmatprep.subr.mxu0 0.0
  %526 = vmatpush2.msra.mxu0 0.0
  %527 = vmatprep.subr.mxu0 0.0
  %528 = vmatpush2.msra.mxu0 0.0
  %529 = vmatprep.subr.mxu0 0.0
  %530 = vmatpush2.msra.mxu0 0.0
  %531 = vmatprep.subr.mxu0 0.0
  %532 = vmatpush2.msra.mxu0 0.0
  %533 = vmatprep.subr.mxu0 0.0
  %534 = vmatpush2.msra.mxu0 0.0
  %535 = vmatprep.subr.mxu0 0.0
  %536 = vmatpush2.msra.mxu0 0.0
  %537 = vmatprep.subr.mxu0 0.0
  %538 = vmatpush2.msra.mxu0 0.0
  %539 = vmatprep.subr.mxu0 0.0
  %540 = vmatpush2.msra.mxu0 0.0
  %541 = vmatprep.subr.mxu0 0.0
  %542 = vmatpush2.msra.mxu0 0.0
  %543 = vmatprep.subr.mxu0 0.0
  %544 = vmatpush2.msra.mxu0 0.0
  %545 = vmatprep.subr.mxu0 0.0
  %546 = vmatpush2.msra.mxu0 0.0
  %547 = vmatprep.subr.mxu0 0.0
  %548 = vmatpush2.msra.mxu0 0.0
  %549 = vmatprep.subr.mxu0 0.0
  %550 = vmatpush2.msra.mxu0 0.0
  %551 = vmatprep.mubr.f32.mxu0 0.0
  %552 = vmatmul.mubr.f32.gmra.mxu0 %v485
  %v553 = vpop.f32.mrf.mxu0
  %v554 = vadd.f32 0.0, %v553
  %v555 = vpop.f32.mrf.mxu0
  %v556 = vadd.f32 0.0, %v555
  %557 = vdwg.mxu0
  %558 = vmatprep.subr.mxu0 0.0
  %559 = vmatpush1.msra.mxu0 0.0
  %560 = vmatprep.subr.mxu0 0.0
  %561 = vmatpush1.msra.mxu0 0.0
  %562 = vmatprep.subr.mxu0 0.0
  %563 = vmatpush1.msra.mxu0 0.0
  %564 = vmatprep.subr.mxu0 0.0
  %565 = vmatpush1.msra.mxu0 0.0
  %566 = vmatprep.subr.mxu0 0.0
  %567 = vmatpush1.msra.mxu0 0.0
  %568 = vmatprep.subr.mxu0 0.0
  %569 = vmatpush1.msra.mxu0 0.0
  %570 = vmatprep.subr.mxu0 0.0
  %571 = vmatpush1.msra.mxu0 0.0
  %572 = vmatprep.subr.mxu0 0.0
  %573 = vmatpush1.msra.mxu0 %v482
  %574 = vmatprep.subr.mxu0 0.0
  %575 = vmatpush1.msra.mxu0 %v473
  %576 = vmatprep.subr.mxu0 0.0
  %577 = vmatpush1.msra.mxu0 %v464
  %578 = vmatprep.subr.mxu0 0.0
  %579 = vmatpush1.msra.mxu0 %v455
  %580 = vmatprep.subr.mxu0 0.0
  %581 = vmatpush1.msra.mxu0 %v410
  %582 = vmatprep.subr.mxu0 0.0
  %583 = vmatpush1.msra.mxu0 %v444
  %584 = vmatprep.subr.mxu0 0.0
  %585 = vmatpush1.msra.mxu0 %v435
  %586 = vmatprep.subr.mxu0 0.0
  %587 = vmatpush1.msra.mxu0 %v426
  %588 = vmatprep.subr.mxu0 0.0
  %589 = vmatpush1.msra.mxu0 %v417
  %590 = vmatprep.subr.mxu0 0.0
  %591 = vmatpush2.msra.mxu0 0.0
  %592 = vmatprep.subr.mxu0 0.0
  %593 = vmatpush2.msra.mxu0 0.0
  %594 = vmatprep.subr.mxu0 0.0
  %595 = vmatpush2.msra.mxu0 0.0
  %596 = vmatprep.subr.mxu0 0.0
  %597 = vmatpush2.msra.mxu0 0.0
  %598 = vmatprep.subr.mxu0 0.0
  %599 = vmatpush2.msra.mxu0 0.0
  %600 = vmatprep.subr.mxu0 0.0
  %601 = vmatpush2.msra.mxu0 0.0
  %602 = vmatprep.subr.mxu0 0.0
  %603 = vmatpush2.msra.mxu0 0.0
  %604 = vmatprep.subr.mxu0 0.0
  %605 = vmatpush2.msra.mxu0 0.0
  %606 = vmatprep.subr.mxu0 0.0
  %607 = vmatpush2.msra.mxu0 0.0
  %608 = vmatprep.subr.mxu0 0.0
  %609 = vmatpush2.msra.mxu0 0.0
  %610 = vmatprep.subr.mxu0 0.0
  %611 = vmatpush2.msra.mxu0 0.0
  %612 = vmatprep.subr.mxu0 0.0
  %613 = vmatpush2.msra.mxu0 0.0
  %614 = vmatprep.subr.mxu0 0.0
  %615 = vmatpush2.msra.mxu0 0.0
  %616 = vmatprep.subr.mxu0 0.0
  %617 = vmatpush2.msra.mxu0 0.0
  %618 = vmatprep.subr.mxu0 0.0
  %619 = vmatpush2.msra.mxu0 0.0
  %620 = vmatprep.subr.mxu0 0.0
  %621 = vmatpush2.msra.mxu0 0.0
  %622 = vmatprep.mubr.f32.mxu0 0.0
  %623 = vmatmul.mubr.f32.gmra.mxu0 %v485
  %v624 = vpop.f32.mrf.mxu0
  %v625 = vadd.f32 0.0, %v624
  %v626 = vpop.f32.mrf.mxu0
  %627 = vdwg.mxu0
  %v628 = vmul.f32 %v554, %v257
  %v629 = vmul.f32 %v556, %v261
  %v630 = vmul.f32 %v625, %v265
  %v631 = vadd.f32 %v628, %v629
  %v632 = vadd.f32 %v631, %v630
  %633 = vadd.xlane.f32.xlu0 %v632
  %v634 = vpop.xlane.xlu0 %633
  %v635 = vmul.f32 %v634, 0.00390625
  %v636 = vsub.f32 %v554, %v635
  %v637 = vsub.f32 %v556, %v635
  %v638 = vsub.f32 %v625, %v635
  %v639 = vmul.f32 %v636, %v257
  %v640 = vmul.f32 %v637, %v261
  %v641 = vmul.f32 %v638, %v265
  %v642 = vmul.f32 %v639, %v639
  %v643 = vmul.f32 %v640, %v640
  %v644 = vmul.f32 %v641, %v641
  %v645 = vadd.f32 %v642, %v643
  %v646 = vadd.f32 %v645, %v644
  %647 = vadd.xlane.f32.xlu0 %v646
  %v648 = vpop.xlane.xlu0 %647
  %v649 = vmul.f32 %v648, 0.00390625
  %v650 = vadd.f32 %v649, 1e-05
  %v651 = vrsqrt.pop %v650
  %v652 = vmul.f32 %v636, %v651
  %v653 = vmul.f32 %v637, %v651
  %v654 = vmul.f32 %v638, %v651
  %v655 = vadd.f32 %v17, %v652
  %v656 = vadd.f32 %v18, %v653
  %v657 = vadd.f32 %v19, %v654
  %658 = vst [vmem:[%s4] sm:$0xff] %v655
  %659 = vst [vmem:[%s4 + $0x8] sm:$0xff] %v656
  %660 = vst [vmem:[%s4 + $0x10] sm:$0xff] %v657
  // Predicated region
  $region18: #{res_block.1} parent=0 // pred_check
    _
  $region19: #{res_block.1} parent=0 // pred_check_branch
    %662 = sbr.rel (0) target = $region21
  $region20: #{res_block.1} parent=0 // pred_region
    _
  $region21: #{res_block.1} parent=0 // pred_fallthru
    _
  // Predicated region
  $region22: #{res_block.1} parent=0 // pred_check
    _
  $region23: #{res_block.1} parent=0 // pred_check_branch
    %664 = sbr.rel (0) target = $region25
  $region24: #{res_block.1} parent=0 // pred_region
    _
  $region25: #{res_block.1} parent=0 // pred_fallthru
    _

</llo_original>
